<compile_context>
chip_gen: v5e
topology: v5e:2x2
jax: 0.10.0
libtpu: 0.0.40
codegen_flags: <defaults>
</compile_context>

<pallas_src>
import functools
import math

import jax
import jax.numpy as jnp
from jax import lax
from jax.experimental import pallas as pl
from jax.experimental.pallas import tpu as pltpu


def _device_kind():
    try:
        return jax.devices()[0].device_kind.lower()
    except Exception:
        return ""


def _pick_tile(n, cap):
    """Largest multiple-of-8 divisor of n that is <= cap (or n itself if n <= cap).

    Fails loudly instead of silently falling back to an untiled (possibly huge)
    block when no aligned divisor exists.
    """
    if n <= cap:
        return n
    t = (cap // 8) * 8
    while t >= 8:
        if n % t == 0:
            return t
        t -= 8
    raise ValueError(
        f"sequence length {n} has no multiple-of-8 tile <= {cap}; pad the "
        "sequence to a multiple of 8 before calling this kernel")


# --------------------------------------------------------------------------- #
# Stage 1: K/V projections, emitted head-major (B, H, S, d_k) in bf16.         #
# --------------------------------------------------------------------------- #
def _kv_proj_kernel(xk_ref, xv_ref, wk_ref, bk_ref, wv_ref, bv_ref, k_ref, v_ref):
    xk = xk_ref[...].astype(jnp.bfloat16)          # (ts, D)
    xv = xv_ref[...].astype(jnp.bfloat16)          # (ts, D)
    num_heads = k_ref.shape[0]
    # Leading-axis (head) indexing only — no lane sub-slicing.  Same total MXU
    # work as one (ts, D) @ (D, D) matmul, but the result lands head-major.
    for h in range(num_heads):
        k = jnp.dot(xk, wk_ref[h], preferred_element_type=jnp.float32) + bk_ref[h]
        v = jnp.dot(xv, wv_ref[h], preferred_element_type=jnp.float32) + bv_ref[h]
        k_ref[h] = k.astype(jnp.bfloat16)
        v_ref[h] = v.astype(jnp.bfloat16)


# --------------------------------------------------------------------------- #
# Stage 2: fused Q projection + flash attention (online softmax) + per-head    #
#          output-projection accumulation into the resident output block.      #
# --------------------------------------------------------------------------- #
def _flash_attn_kernel(xq_ref, k_ref, v_ref, wq_ref, bq_ref, wo_ref, bo_ref,
                       out_ref, q_scr, m_scr, l_scr, acc_scr, *, scale):
    h = pl.program_id(2)
    kv = pl.program_id(3)
    n_kv = pl.num_programs(3)

    @pl.when(kv == 0)
    def _init():
        # Project this head's Q tile once per (b, q_tile, head); fold bias and
        # the 1/sqrt(d_k) scale here (once per Q element, not per score).
        xq = xq_ref[...].astype(jnp.bfloat16)                          # (tq, D)
        q = jnp.dot(xq, wq_ref[...], preferred_element_type=jnp.float32)
        q_scr[...] = ((q + bq_ref[...]) * scale).astype(jnp.bfloat16)  # (tq, d_k)
        m_scr[...] = jnp.full_like(m_scr, -jnp.inf)
        l_scr[...] = jnp.zeros_like(l_scr)
        acc_scr[...] = jnp.zeros_like(acc_scr)

    q = q_scr[...]          # (tq, d_k)  bf16, scaled
    k = k_ref[...]          # (tkv, d_k) bf16
    v = v_ref[...]          # (tkv, d_k) bf16

    # scores (tq, tkv): contract the LAST dims of Q and K -> no K transpose.
    s = lax.dot_general(q, k, (((1,), (1,)), ((), ())),
                        preferred_element_type=jnp.float32)

    m_prev = m_scr[...]                                                # (tq, 1)
    m_new = jnp.maximum(m_prev, jnp.max(s, axis=-1, keepdims=True))
    alpha = jnp.exp(m_prev - m_new)
    p = jnp.exp(s - m_new)                                             # (tq, tkv)
    l_scr[...] = alpha * l_scr[...] + jnp.sum(p, axis=-1, keepdims=True)
    m_scr[...] = m_new
    acc_scr[...] = alpha * acc_scr[...] + jnp.dot(
        p.astype(jnp.bfloat16), v, preferred_element_type=jnp.float32)  # (tq, d_k)

    @pl.when(kv == n_kv - 1)
    def _finalize():
        inv_l = pl.reciprocal(l_scr[...], approx=True)                 # EUP slot
        ctx = (acc_scr[...] * inv_l).astype(jnp.bfloat16)              # (tq, d_k)
        # Per-head partial output projection: no lane-axis concat of heads.
        partial = jnp.dot(ctx, wo_ref[...],
                          preferred_element_type=jnp.float32)          # (tq, D)

        @pl.when(h == 0)
        def _first_head():
            out_ref[...] = bo_ref[...] + partial

        @pl.when(h != 0)
        def _other_heads():
            out_ref[...] = out_ref[...] + partial


def multi_head_attention(query, key, value, params, *, num_heads):
    """query/key/value: (B, S, D) f32. params: dict of torch-convention weights."""
    B, S, D = query.shape
    assert D % num_heads == 0
    d_k = D // num_heads
    scale = 1.0 / math.sqrt(d_k)

    # Per-generation tiling / VMEM budget (v5e/v6e: 128 MiB physical VMEM;
    # v7x: 64 MiB -> conservative limit and tile caps).
    kind = _device_kind()
    if ("v5" in kind) or ("v6" in kind):
        vmem_limit = 100 * 1024 * 1024
        ts_cap, tq_cap, tkv_cap = 512, 256, 512
    else:
        vmem_limit = 48 * 1024 * 1024
        ts_cap, tq_cap, tkv_cap = 256, 256, 256

    # ---- Host-side glue: head-major weight layouts (torch Linear stores W as
    # (out, in); x @ w_hm[h] == (x @ W.T)[:, h*d_k:(h+1)*d_k]). bf16 for the MXU.
    def w_hm(w):
        return jnp.asarray(w).T.reshape(D, num_heads, d_k).transpose(1, 0, 2).astype(jnp.bfloat16)

    def b_hm(b):
        return jnp.asarray(b).reshape(num_heads, 1, d_k).astype(jnp.float32)

    wq_hm, wk_hm, wv_hm = w_hm(params["wq"]), w_hm(params["wk"]), w_hm(params["wv"])
    bq_hm, bk_hm, bv_hm = b_hm(params["bq"]), b_hm(params["bk"]), b_hm(params["bv"])
    # Output projection rows grouped per head: sum_h ctx_h @ wo_hm[h] == concat @ Wo.T
    wo_hm = jnp.asarray(params["wo"]).T.reshape(num_heads, d_k, D).astype(jnp.bfloat16)
    bo = jnp.asarray(params["bo"]).reshape(1, D).astype(jnp.float32)

    # ---------------- Stage 1: K/V projections (head-major output) ----------- #
    ts = _pick_tile(S, cap=ts_cap)
    x_spec = pl.BlockSpec((None, ts, D), lambda b, s: (b, s, 0))
    w_spec1 = pl.BlockSpec((num_heads, D, d_k), lambda b, s: (0, 0, 0))
    b_spec1 = pl.BlockSpec((num_heads, 1, d_k), lambda b, s: (0, 0, 0))
    kv_out_spec = pl.BlockSpec((None, num_heads, ts, d_k), lambda b, s: (b, 0, s, 0))

    k_hm, v_hm = pl.pallas_call(
        _kv_proj_kernel,
        out_shape=(jax.ShapeDtypeStruct((B, num_heads, S, d_k), jnp.bfloat16),) * 2,
        grid_spec=pltpu.PrefetchScalarGridSpec(
            num_scalar_prefetch=0,
            grid=(B, S // ts),
            in_specs=[x_spec, x_spec, w_spec1, b_spec1, w_spec1, b_spec1],
            out_specs=[kv_out_spec, kv_out_spec],
        ),
        compiler_params=pltpu.CompilerParams(
            dimension_semantics=("parallel", "parallel"),
            vmem_limit_bytes=vmem_limit),
    )(key, value, wk_hm, bk_hm, wv_hm, bv_hm)

    # ------- Stage 2: fused Q proj + flash attention + output projection ----- #
    tq = _pick_tile(S, cap=tq_cap)
    tkv = _pick_tile(S, cap=tkv_cap)

    # Grid order (B, q_tile, head, kv): query/out block indices are constant
    # across (head, kv) -> DMA'd once per (b, q_tile) and the output block acts
    # as the cross-head accumulator.  B * (S//tq) "parallel" steps for v7x's
    # two TensorCores (>= 2 here).
    xq_spec = pl.BlockSpec((None, tq, D), lambda b, qi, h, ki: (b, qi, 0))
    kv_spec = pl.BlockSpec((None, None, tkv, d_k), lambda b, qi, h, ki: (b, h, ki, 0))
    wq_spec = pl.BlockSpec((None, D, d_k), lambda b, qi, h, ki: (h, 0, 0))
    bq_spec = pl.BlockSpec((None, 1, d_k), lambda b, qi, h, ki: (h, 0, 0))
    wo_spec = pl.BlockSpec((None, d_k, D), lambda b, qi, h, ki: (h, 0, 0))
    bo_spec = pl.BlockSpec((1, D), lambda b, qi, h, ki: (0, 0))
    out_spec = pl.BlockSpec((None, tq, D), lambda b, qi, h, ki: (b, qi, 0))

    out = pl.pallas_call(
        functools.partial(_flash_attn_kernel, scale=scale),
        out_shape=jax.ShapeDtypeStruct((B, S, D), jnp.float32),
        grid_spec=pltpu.PrefetchScalarGridSpec(
            num_scalar_prefetch=0,
            grid=(B, S // tq, num_heads, S // tkv),
            in_specs=[xq_spec, kv_spec, kv_spec, wq_spec, bq_spec, wo_spec, bo_spec],
            out_specs=out_spec,
            scratch_shapes=[
                pltpu.VMEM((tq, d_k), jnp.bfloat16),   # projected, scaled Q (current head)
                pltpu.VMEM((tq, 1), jnp.float32),      # running max m
                pltpu.VMEM((tq, 1), jnp.float32),      # running sum l
                pltpu.VMEM((tq, d_k), jnp.float32),    # unnormalized context
            ],
        ),
        compiler_params=pltpu.CompilerParams(
            dimension_semantics=("parallel", "parallel", "arbitrary", "arbitrary"),
            vmem_limit_bytes=vmem_limit),
    )(query, k_hm, v_hm, wq_hm, bq_hm, wo_hm, bo)
    return out


def _reference_mha(query, key, value, params, *, num_heads):
    """Pure-JAX f32 reference mirroring the PyTorch forward (mask=None, eval)."""
    B, S, D = query.shape
    d_k = D // num_heads

    def lin(x, w, b):
        return x @ w.T + b

    q = lin(query, params["wq"], params["bq"]).reshape(B, S, num_heads, d_k).transpose(0, 2, 1, 3)
    k = lin(key, params["wk"], params["bk"]).reshape(B, S, num_heads, d_k).transpose(0, 2, 1, 3)
    v = lin(value, params["wv"], params["bv"]).reshape(B, S, num_heads, d_k).transpose(0, 2, 1, 3)
    scores = jnp.einsum("bhqd,bhkd->bhqk", q, k) / math.sqrt(d_k)
    attn = jax.nn.softmax(scores, axis=-1)
    out = jnp.einsum("bhqk,bhkd->bhqd", attn, v)
    out = out.transpose(0, 2, 1, 3).reshape(B, S, D)
    return lin(out, params["wo"], params["bo"])


def _init_params(key, d_model):
    """Deterministic init matching torch.nn.Linear defaults: U(-1/sqrt(in), 1/sqrt(in))."""
    bound = 1.0 / math.sqrt(d_model)
    names = ["wq", "bq", "wk", "bk", "wv", "bv", "wo", "bo"]
    keys = jax.random.split(key, len(names))
    params = {}
    for n, kk in zip(names, keys):
        shape = (d_model, d_model) if n.startswith("w") else (d_model,)
        params[n] = jax.random.uniform(kk, shape, jnp.float32, minval=-bound, maxval=bound)
    return params


if __name__ == "__main__":
    B, S, D, H = 2, 8, 32, 4

    root = jax.random.PRNGKey(0)
    kq, kk, kv_, kp = jax.random.split(root, 4)
    query = jax.random.normal(kq, (B, S, D), jnp.float32)
    key_in = jax.random.normal(kk, (B, S, D), jnp.float32)
    value = jax.random.normal(kv_, (B, S, D), jnp.float32)
    params = _init_params(kp, D)

    out = multi_head_attention(query, key_in, value, params, num_heads=H)
    out = jax.block_until_ready(out)

    ref = _reference_mha(query, key_in, value, params, num_heads=H)
    assert out.shape == (B, S, D)
    # bf16 MXU operands (f32 accumulate) + approx reciprocal => looser tolerance.
    assert jnp.allclose(out, ref, atol=5e-2, rtol=5e-2), "mismatch vs pure-JAX reference"

    print("KERNEL_OK")
</pallas_src>

<mosaic_0001>
module attributes {stable_mosaic.version = 11 : i64} {
  func.func @_kv_proj_kernel(%arg0: i32, %arg1: i32, %arg2: memref<1x8x32xf32, #tpu.memory_space<vmem>>, %arg3: memref<1x8x32xf32, #tpu.memory_space<vmem>>, %arg4: memref<4x32x8xbf16, #tpu.memory_space<vmem>>, %arg5: memref<4x1x8xf32, #tpu.memory_space<vmem>>, %arg6: memref<4x32x8xbf16, #tpu.memory_space<vmem>>, %arg7: memref<4x1x8xf32, #tpu.memory_space<vmem>>, %arg8: memref<1x4x8x8xbf16, #tpu.memory_space<vmem>>, %arg9: memref<1x4x8x8xbf16, #tpu.memory_space<vmem>>) attributes {dimension_semantics = [#tpu.dimension_semantics<parallel>, #tpu.dimension_semantics<parallel>], iteration_bounds = array<i64: 2, 1>, scalar_prefetch = 0 : i64, scratch_operands = 0 : i64, tpu.core_type = #tpu.core_type<tc>, window_params = [{transform_indices = @transform_0, window_bounds = array<i64: 1, 8, 32>}, {transform_indices = @transform_1, window_bounds = array<i64: 1, 8, 32>}, {pipeline_mode = #tpu.pipeline_mode<synchronous>, transform_indices = @transform_2, window_bounds = array<i64: 4, 32, 8>}, {pipeline_mode = #tpu.pipeline_mode<synchronous>, transform_indices = @transform_3, window_bounds = array<i64: 4, 1, 8>}, {pipeline_mode = #tpu.pipeline_mode<synchronous>, transform_indices = @transform_4, window_bounds = array<i64: 4, 32, 8>}, {pipeline_mode = #tpu.pipeline_mode<synchronous>, transform_indices = @transform_5, window_bounds = array<i64: 4, 1, 8>}, {transform_indices = @transform_6, window_bounds = array<i64: 1, 4, 8, 8>}, {transform_indices = @transform_7, window_bounds = array<i64: 1, 4, 8, 8>}]} {
    %c0 = arith.constant 0 : index
    %c0_0 = arith.constant 0 : index
    %c0_1 = arith.constant 0 : index
    %0 = vector.load %arg2[%c0, %c0_0, %c0_1] : memref<1x8x32xf32, #tpu.memory_space<vmem>>, vector<1x8x32xf32>
    %1 = vector.shape_cast %0 : vector<1x8x32xf32> to vector<8x32xf32>
    %2 = arith.truncf %1 : vector<8x32xf32> to vector<8x32xbf16>
    %c0_2 = arith.constant 0 : index
    %c0_3 = arith.constant 0 : index
    %c0_4 = arith.constant 0 : index
    %3 = vector.load %arg3[%c0_2, %c0_3, %c0_4] : memref<1x8x32xf32, #tpu.memory_space<vmem>>, vector<1x8x32xf32>
    %4 = vector.shape_cast %3 : vector<1x8x32xf32> to vector<8x32xf32>
    %5 = arith.truncf %4 : vector<8x32xf32> to vector<8x32xbf16>
    %c0_5 = arith.constant 0 : index
    %c0_6 = arith.constant 0 : index
    %c0_7 = arith.constant 0 : index
    %6 = vector.load %arg4[%c0_5, %c0_6, %c0_7] : memref<4x32x8xbf16, #tpu.memory_space<vmem>>, vector<1x32x8xbf16>
    %7 = vector.shape_cast %6 : vector<1x32x8xbf16> to vector<32x8xbf16>
    %cst = arith.constant dense<0.000000e+00> : vector<8x8xf32>
    %8 = tpu.matmul %2, %7, %cst {dimension_numbers = #tpu.dot_dimension_numbers<[1], [0], [0], [1], [0, 0, 1, 1], [], []>} : vector<8x32xbf16>, vector<32x8xbf16>, vector<8x8xf32> -> vector<8x8xf32>
    %c0_8 = arith.constant 0 : index
    %c0_9 = arith.constant 0 : index
    %c0_10 = arith.constant 0 : index
    %9 = vector.load %arg5[%c0_8, %c0_9, %c0_10] : memref<4x1x8xf32, #tpu.memory_space<vmem>>, vector<1x1x8xf32>
    %10 = vector.shape_cast %9 : vector<1x1x8xf32> to vector<1x8xf32>
    %11 = vector.broadcast %10 : vector<1x8xf32> to vector<8x8xf32>
    %12 = arith.addf %8, %11 : vector<8x8xf32>
    %c0_11 = arith.constant 0 : index
    %c0_12 = arith.constant 0 : index
    %c0_13 = arith.constant 0 : index
    %13 = vector.load %arg6[%c0_11, %c0_12, %c0_13] : memref<4x32x8xbf16, #tpu.memory_space<vmem>>, vector<1x32x8xbf16>
    %14 = vector.shape_cast %13 : vector<1x32x8xbf16> to vector<32x8xbf16>
    %cst_14 = arith.constant dense<0.000000e+00> : vector<8x8xf32>
    %15 = tpu.matmul %5, %14, %cst_14 {dimension_numbers = #tpu.dot_dimension_numbers<[1], [0], [0], [1], [0, 0, 1, 1], [], []>} : vector<8x32xbf16>, vector<32x8xbf16>, vector<8x8xf32> -> vector<8x8xf32>
    %c0_15 = arith.constant 0 : index
    %c0_16 = arith.constant 0 : index
    %c0_17 = arith.constant 0 : index
    %16 = vector.load %arg7[%c0_15, %c0_16, %c0_17] : memref<4x1x8xf32, #tpu.memory_space<vmem>>, vector<1x1x8xf32>
    %17 = vector.shape_cast %16 : vector<1x1x8xf32> to vector<1x8xf32>
    %18 = vector.broadcast %17 : vector<1x8xf32> to vector<8x8xf32>
    %19 = arith.addf %15, %18 : vector<8x8xf32>
    %20 = arith.truncf %12 : vector<8x8xf32> to vector<8x8xbf16>
    %c0_18 = arith.constant 0 : index
    %c0_19 = arith.constant 0 : index
    %c0_20 = arith.constant 0 : index
    %c0_21 = arith.constant 0 : index
    %21 = vector.load %arg8[%c0_18, %c0_19, %c0_20, %c0_21] : memref<1x4x8x8xbf16, #tpu.memory_space<vmem>>, vector<1x1x8x8xbf16>
    %22 = vector.shape_cast %21 : vector<1x1x8x8xbf16> to vector<8x8xbf16>
    %23 = vector.shape_cast %20 : vector<8x8xbf16> to vector<1x1x8x8xbf16>
    tpu.vector_store %arg8[%c0_18, %c0_19, %c0_20, %c0_21], %23 {strides = array<i32>} : memref<1x4x8x8xbf16, #tpu.memory_space<vmem>>, vector<1x1x8x8xbf16>,
    %24 = arith.truncf %19 : vector<8x8xf32> to vector<8x8xbf16>
    %c0_22 = arith.constant 0 : index
    %c0_23 = arith.constant 0 : index
    %c0_24 = arith.constant 0 : index
    %c0_25 = arith.constant 0 : index
    %25 = vector.load %arg9[%c0_22, %c0_23, %c0_24, %c0_25] : memref<1x4x8x8xbf16, #tpu.memory_space<vmem>>, vector<1x1x8x8xbf16>
    %26 = vector.shape_cast %25 : vector<1x1x8x8xbf16> to vector<8x8xbf16>
    %27 = vector.shape_cast %24 : vector<8x8xbf16> to vector<1x1x8x8xbf16>
    tpu.vector_store %arg9[%c0_22, %c0_23, %c0_24, %c0_25], %27 {strides = array<i32>} : memref<1x4x8x8xbf16, #tpu.memory_space<vmem>>, vector<1x1x8x8xbf16>,
    %c1 = arith.constant 1 : index
    %c0_26 = arith.constant 0 : index
    %c0_27 = arith.constant 0 : index
    %28 = vector.load %arg4[%c1, %c0_26, %c0_27] : memref<4x32x8xbf16, #tpu.memory_space<vmem>>, vector<1x32x8xbf16>
    %29 = vector.shape_cast %28 : vector<1x32x8xbf16> to vector<32x8xbf16>
    %cst_28 = arith.constant dense<0.000000e+00> : vector<8x8xf32>
    %30 = tpu.matmul %2, %29, %cst_28 {dimension_numbers = #tpu.dot_dimension_numbers<[1], [0], [0], [1], [0, 0, 1, 1], [], []>} : vector<8x32xbf16>, vector<32x8xbf16>, vector<8x8xf32> -> vector<8x8xf32>
    %c1_29 = arith.constant 1 : index
    %c0_30 = arith.constant 0 : index
    %c0_31 = arith.constant 0 : index
    %31 = vector.load %arg5[%c1_29, %c0_30, %c0_31] : memref<4x1x8xf32, #tpu.memory_space<vmem>>, vector<1x1x8xf32>
    %32 = vector.shape_cast %31 : vector<1x1x8xf32> to vector<1x8xf32>
    %33 = vector.broadcast %32 : vector<1x8xf32> to vector<8x8xf32>
    %34 = arith.addf %30, %33 : vector<8x8xf32>
    %c1_32 = arith.constant 1 : index
    %c0_33 = arith.constant 0 : index
    %c0_34 = arith.constant 0 : index
    %35 = vector.load %arg6[%c1_32, %c0_33, %c0_34] : memref<4x32x8xbf16, #tpu.memory_space<vmem>>, vector<1x32x8xbf16>
    %36 = vector.shape_cast %35 : vector<1x32x8xbf16> to vector<32x8xbf16>
    %cst_35 = arith.constant dense<0.000000e+00> : vector<8x8xf32>
    %37 = tpu.matmul %5, %36, %cst_35 {dimension_numbers = #tpu.dot_dimension_numbers<[1], [0], [0], [1], [0, 0, 1, 1], [], []>} : vector<8x32xbf16>, vector<32x8xbf16>, vector<8x8xf32> -> vector<8x8xf32>
    %c1_36 = arith.constant 1 : index
    %c0_37 = arith.constant 0 : index
    %c0_38 = arith.constant 0 : index
    %38 = vector.load %arg7[%c1_36, %c0_37, %c0_38] : memref<4x1x8xf32, #tpu.memory_space<vmem>>, vector<1x1x8xf32>
    %39 = vector.shape_cast %38 : vector<1x1x8xf32> to vector<1x8xf32>
    %40 = vector.broadcast %39 : vector<1x8xf32> to vector<8x8xf32>
    %41 = arith.addf %37, %40 : vector<8x8xf32>
    %42 = arith.truncf %34 : vector<8x8xf32> to vector<8x8xbf16>
    %c0_39 = arith.constant 0 : index
    %c1_40 = arith.constant 1 : index
    %c0_41 = arith.constant 0 : index
    %c0_42 = arith.constant 0 : index
    %43 = vector.load %arg8[%c0_39, %c1_40, %c0_41, %c0_42] : memref<1x4x8x8xbf16, #tpu.memory_space<vmem>>, vector<1x1x8x8xbf16>
    %44 = vector.shape_cast %43 : vector<1x1x8x8xbf16> to vector<8x8xbf16>
    %45 = vector.shape_cast %42 : vector<8x8xbf16> to vector<1x1x8x8xbf16>
    tpu.vector_store %arg8[%c0_39, %c1_40, %c0_41, %c0_42], %45 {strides = array<i32>} : memref<1x4x8x8xbf16, #tpu.memory_space<vmem>>, vector<1x1x8x8xbf16>,
    %46 = arith.truncf %41 : vector<8x8xf32> to vector<8x8xbf16>
    %c0_43 = arith.constant 0 : index
    %c1_44 = arith.constant 1 : index
    %c0_45 = arith.constant 0 : index
    %c0_46 = arith.constant 0 : index
    %47 = vector.load %arg9[%c0_43, %c1_44, %c0_45, %c0_46] : memref<1x4x8x8xbf16, #tpu.memory_space<vmem>>, vector<1x1x8x8xbf16>
    %48 = vector.shape_cast %47 : vector<1x1x8x8xbf16> to vector<8x8xbf16>
    %49 = vector.shape_cast %46 : vector<8x8xbf16> to vector<1x1x8x8xbf16>
    tpu.vector_store %arg9[%c0_43, %c1_44, %c0_45, %c0_46], %49 {strides = array<i32>} : memref<1x4x8x8xbf16, #tpu.memory_space<vmem>>, vector<1x1x8x8xbf16>,
    %c2 = arith.constant 2 : index
    %c0_47 = arith.constant 0 : index
    %c0_48 = arith.constant 0 : index
    %50 = vector.load %arg4[%c2, %c0_47, %c0_48] : memref<4x32x8xbf16, #tpu.memory_space<vmem>>, vector<1x32x8xbf16>
    %51 = vector.shape_cast %50 : vector<1x32x8xbf16> to vector<32x8xbf16>
    %cst_49 = arith.constant dense<0.000000e+00> : vector<8x8xf32>
    %52 = tpu.matmul %2, %51, %cst_49 {dimension_numbers = #tpu.dot_dimension_numbers<[1], [0], [0], [1], [0, 0, 1, 1], [], []>} : vector<8x32xbf16>, vector<32x8xbf16>, vector<8x8xf32> -> vector<8x8xf32>
    %c2_50 = arith.constant 2 : index
    %c0_51 = arith.constant 0 : index
    %c0_52 = arith.constant 0 : index
    %53 = vector.load %arg5[%c2_50, %c0_51, %c0_52] : memref<4x1x8xf32, #tpu.memory_space<vmem>>, vector<1x1x8xf32>
    %54 = vector.shape_cast %53 : vector<1x1x8xf32> to vector<1x8xf32>
    %55 = vector.broadcast %54 : vector<1x8xf32> to vector<8x8xf32>
    %56 = arith.addf %52, %55 : vector<8x8xf32>
    %c2_53 = arith.constant 2 : index
    %c0_54 = arith.constant 0 : index
    %c0_55 = arith.constant 0 : index
    %57 = vector.load %arg6[%c2_53, %c0_54, %c0_55] : memref<4x32x8xbf16, #tpu.memory_space<vmem>>, vector<1x32x8xbf16>
    %58 = vector.shape_cast %57 : vector<1x32x8xbf16> to vector<32x8xbf16>
    %cst_56 = arith.constant dense<0.000000e+00> : vector<8x8xf32>
    %59 = tpu.matmul %5, %58, %cst_56 {dimension_numbers = #tpu.dot_dimension_numbers<[1], [0], [0], [1], [0, 0, 1, 1], [], []>} : vector<8x32xbf16>, vector<32x8xbf16>, vector<8x8xf32> -> vector<8x8xf32>
    %c2_57 = arith.constant 2 : index
    %c0_58 = arith.constant 0 : index
    %c0_59 = arith.constant 0 : index
    %60 = vector.load %arg7[%c2_57, %c0_58, %c0_59] : memref<4x1x8xf32, #tpu.memory_space<vmem>>, vector<1x1x8xf32>
    %61 = vector.shape_cast %60 : vector<1x1x8xf32> to vector<1x8xf32>
    %62 = vector.broadcast %61 : vector<1x8xf32> to vector<8x8xf32>
    %63 = arith.addf %59, %62 : vector<8x8xf32>
    %64 = arith.truncf %56 : vector<8x8xf32> to vector<8x8xbf16>
    %c0_60 = arith.constant 0 : index
    %c2_61 = arith.constant 2 : index
    %c0_62 = arith.constant 0 : index
    %c0_63 = arith.constant 0 : index
    %65 = vector.load %arg8[%c0_60, %c2_61, %c0_62, %c0_63] : memref<1x4x8x8xbf16, #tpu.memory_space<vmem>>, vector<1x1x8x8xbf16>
    %66 = vector.shape_cast %65 : vector<1x1x8x8xbf16> to vector<8x8xbf16>
    %67 = vector.shape_cast %64 : vector<8x8xbf16> to vector<1x1x8x8xbf16>
    tpu.vector_store %arg8[%c0_60, %c2_61, %c0_62, %c0_63], %67 {strides = array<i32>} : memref<1x4x8x8xbf16, #tpu.memory_space<vmem>>, vector<1x1x8x8xbf16>,
    %68 = arith.truncf %63 : vector<8x8xf32> to vector<8x8xbf16>
    %c0_64 = arith.constant 0 : index
    %c2_65 = arith.constant 2 : index
    %c0_66 = arith.constant 0 : index
    %c0_67 = arith.constant 0 : index
    %69 = vector.load %arg9[%c0_64, %c2_65, %c0_66, %c0_67] : memref<1x4x8x8xbf16, #tpu.memory_space<vmem>>, vector<1x1x8x8xbf16>
    %70 = vector.shape_cast %69 : vector<1x1x8x8xbf16> to vector<8x8xbf16>
    %71 = vector.shape_cast %68 : vector<8x8xbf16> to vector<1x1x8x8xbf16>
    tpu.vector_store %arg9[%c0_64, %c2_65, %c0_66, %c0_67], %71 {strides = array<i32>} : memref<1x4x8x8xbf16, #tpu.memory_space<vmem>>, vector<1x1x8x8xbf16>,
    %c3 = arith.constant 3 : index
    %c0_68 = arith.constant 0 : index
    %c0_69 = arith.constant 0 : index
    %72 = vector.load %arg4[%c3, %c0_68, %c0_69] : memref<4x32x8xbf16, #tpu.memory_space<vmem>>, vector<1x32x8xbf16>
    %73 = vector.shape_cast %72 : vector<1x32x8xbf16> to vector<32x8xbf16>
    %cst_70 = arith.constant dense<0.000000e+00> : vector<8x8xf32>
    %74 = tpu.matmul %2, %73, %cst_70 {dimension_numbers = #tpu.dot_dimension_numbers<[1], [0], [0], [1], [0, 0, 1, 1], [], []>} : vector<8x32xbf16>, vector<32x8xbf16>, vector<8x8xf32> -> vector<8x8xf32>
    %c3_71 = arith.constant 3 : index
    %c0_72 = arith.constant 0 : index
    %c0_73 = arith.constant 0 : index
    %75 = vector.load %arg5[%c3_71, %c0_72, %c0_73] : memref<4x1x8xf32, #tpu.memory_space<vmem>>, vector<1x1x8xf32>
    %76 = vector.shape_cast %75 : vector<1x1x8xf32> to vector<1x8xf32>
    %77 = vector.broadcast %76 : vector<1x8xf32> to vector<8x8xf32>
    %78 = arith.addf %74, %77 : vector<8x8xf32>
    %c3_74 = arith.constant 3 : index
    %c0_75 = arith.constant 0 : index
    %c0_76 = arith.constant 0 : index
    %79 = vector.load %arg6[%c3_74, %c0_75, %c0_76] : memref<4x32x8xbf16, #tpu.memory_space<vmem>>, vector<1x32x8xbf16>
    %80 = vector.shape_cast %79 : vector<1x32x8xbf16> to vector<32x8xbf16>
    %cst_77 = arith.constant dense<0.000000e+00> : vector<8x8xf32>
    %81 = tpu.matmul %5, %80, %cst_77 {dimension_numbers = #tpu.dot_dimension_numbers<[1], [0], [0], [1], [0, 0, 1, 1], [], []>} : vector<8x32xbf16>, vector<32x8xbf16>, vector<8x8xf32> -> vector<8x8xf32>
    %c3_78 = arith.constant 3 : index
    %c0_79 = arith.constant 0 : index
    %c0_80 = arith.constant 0 : index
    %82 = vector.load %arg7[%c3_78, %c0_79, %c0_80] : memref<4x1x8xf32, #tpu.memory_space<vmem>>, vector<1x1x8xf32>
    %83 = vector.shape_cast %82 : vector<1x1x8xf32> to vector<1x8xf32>
    %84 = vector.broadcast %83 : vector<1x8xf32> to vector<8x8xf32>
    %85 = arith.addf %81, %84 : vector<8x8xf32>
    %86 = arith.truncf %78 : vector<8x8xf32> to vector<8x8xbf16>
    %c0_81 = arith.constant 0 : index
    %c3_82 = arith.constant 3 : index
    %c0_83 = arith.constant 0 : index
    %c0_84 = arith.constant 0 : index
    %87 = vector.load %arg8[%c0_81, %c3_82, %c0_83, %c0_84] : memref<1x4x8x8xbf16, #tpu.memory_space<vmem>>, vector<1x1x8x8xbf16>
    %88 = vector.shape_cast %87 : vector<1x1x8x8xbf16> to vector<8x8xbf16>
    %89 = vector.shape_cast %86 : vector<8x8xbf16> to vector<1x1x8x8xbf16>
    tpu.vector_store %arg8[%c0_81, %c3_82, %c0_83, %c0_84], %89 {strides = array<i32>} : memref<1x4x8x8xbf16, #tpu.memory_space<vmem>>, vector<1x1x8x8xbf16>,
    %90 = arith.truncf %85 : vector<8x8xf32> to vector<8x8xbf16>
    %c0_85 = arith.constant 0 : index
    %c3_86 = arith.constant 3 : index
    %c0_87 = arith.constant 0 : index
    %c0_88 = arith.constant 0 : index
    %91 = vector.load %arg9[%c0_85, %c3_86, %c0_87, %c0_88] : memref<1x4x8x8xbf16, #tpu.memory_space<vmem>>, vector<1x1x8x8xbf16>
    %92 = vector.shape_cast %91 : vector<1x1x8x8xbf16> to vector<8x8xbf16>
    %93 = vector.shape_cast %90 : vector<8x8xbf16> to vector<1x1x8x8xbf16>
    tpu.vector_store %arg9[%c0_85, %c3_86, %c0_87, %c0_88], %93 {strides = array<i32>} : memref<1x4x8x8xbf16, #tpu.memory_space<vmem>>, vector<1x1x8x8xbf16>,
    return
  }
  func.func @transform_0(%arg0: i32, %arg1: i32) -> (i32, i32, i32) {
    %c0_i32 = arith.constant 0 : i32
    %c0_i32_0 = arith.constant 0 : i32
    return %arg0, %arg1, %c0_i32 : i32, i32, i32
  }
  func.func @transform_1(%arg0: i32, %arg1: i32) -> (i32, i32, i32) {
    %c0_i32 = arith.constant 0 : i32
    %c0_i32_0 = arith.constant 0 : i32
    return %arg0, %arg1, %c0_i32 : i32, i32, i32
  }
  func.func @transform_2(%arg0: i32, %arg1: i32) -> (i32, i32, i32) {
    %c0_i32 = arith.constant 0 : i32
    %c0_i32_0 = arith.constant 0 : i32
    %c0_i32_1 = arith.constant 0 : i32
    %c0_i32_2 = arith.constant 0 : i32
    return %c0_i32, %c0_i32_0, %c0_i32_1 : i32, i32, i32
  }
  func.func @transform_3(%arg0: i32, %arg1: i32) -> (i32, i32, i32) {
    %c0_i32 = arith.constant 0 : i32
    %c0_i32_0 = arith.constant 0 : i32
    %c0_i32_1 = arith.constant 0 : i32
    %c0_i32_2 = arith.constant 0 : i32
    return %c0_i32, %c0_i32_0, %c0_i32_1 : i32, i32, i32
  }
  func.func @transform_4(%arg0: i32, %arg1: i32) -> (i32, i32, i32) {
    %c0_i32 = arith.constant 0 : i32
    %c0_i32_0 = arith.constant 0 : i32
    %c0_i32_1 = arith.constant 0 : i32
    %c0_i32_2 = arith.constant 0 : i32
    return %c0_i32, %c0_i32_0, %c0_i32_1 : i32, i32, i32
  }
  func.func @transform_5(%arg0: i32, %arg1: i32) -> (i32, i32, i32) {
    %c0_i32 = arith.constant 0 : i32
    %c0_i32_0 = arith.constant 0 : i32
    %c0_i32_1 = arith.constant 0 : i32
    %c0_i32_2 = arith.constant 0 : i32
    return %c0_i32, %c0_i32_0, %c0_i32_1 : i32, i32, i32
  }
  func.func @transform_6(%arg0: i32, %arg1: i32) -> (i32, i32, i32, i32) {
    %c0_i32 = arith.constant 0 : i32
    %c0_i32_0 = arith.constant 0 : i32
    %c0_i32_1 = arith.constant 0 : i32
    return %arg0, %c0_i32, %arg1, %c0_i32_0 : i32, i32, i32, i32
  }
  func.func @transform_7(%arg0: i32, %arg1: i32) -> (i32, i32, i32, i32) {
    %c0_i32 = arith.constant 0 : i32
    %c0_i32_0 = arith.constant 0 : i32
    %c0_i32_1 = arith.constant 0 : i32
    return %arg0, %c0_i32, %arg1, %c0_i32_0 : i32, i32, i32, i32
  }
}

</mosaic_0001>

<llo_original>
// kernel: tpu_custom_call.1
$region0: #{tpu_custom_call.1}
  #allocation0 [shape = 'u32[]', space=smem, size = 0x4, offset = 0x4, fixed_abs, tag = 'smem constant byte address 0x4 - core index']
  #allocation1 [shape = 'u32[72,128]{1,0:T(1,128)}', space=vmem, size = 0x9000, scoped, tag = 'internal scratch']
  %s0 = inlined_call_operand.vmem [shape: f32[2,8,32], index: 0, kind: input, shape index: {}]
  %s1 = inlined_call_operand.vmem [shape: f32[2,8,32], index: 1, kind: input, shape index: {}]
  %s2 = inlined_call_operand.vmem [shape: bf16[4,32,8], index: 2, kind: input, shape index: {}]
  %s3 = inlined_call_operand.vmem [shape: f32[4,1,8], index: 3, kind: input, shape index: {}]
  %s4 = inlined_call_operand.vmem [shape: bf16[4,32,8], index: 4, kind: input, shape index: {}]
  %s5 = inlined_call_operand.vmem [shape: f32[4,1,8], index: 5, kind: input, shape index: {}]
  %s6 = inlined_call_operand.hbm [shape: bf16[2,4,8,8], index: 6, kind: output, shape index: {0}]
  %s7 = inlined_call_operand.hbm [shape: bf16[2,4,8,8], index: 7, kind: output, shape index: {1}]
  %8 = xla_tuple %s6, %s7
  %s9 = sld [smem:[#allocation0]]
  $region65: #{tpu_custom_call.1} parent=0
    _
  %s11 = ssub.s32 1, %s9
  %s12 = scalar_select 0, %s11, %s9
  $region1: #{tpu_custom_call.1} parent=0
    #allocation2 [shape = 'u8[16384]{0}', space=vmem, size = 0x4000, scoped, tag = 'output window, operand 0']
    #allocation3 [shape = 's32[2]{0}', space=sflag, size = 0x8, scoped, tag = 'scoped memory for tpu_custom_call.1']
    #allocation4 [shape = 'u8[16384]{0}', space=vmem, size = 0x4000, scoped, tag = 'output window, operand 1']
    #allocation5 [shape = 's32[2]{0}', space=sflag, size = 0x8, scoped, tag = 'scoped memory for tpu_custom_call.1']
    %13 = vsyncpa [#allocation3], 0
    %s14 = scalar_lea.sflag [#allocation3], 1
    %15 = vsyncpa %s14, 0
    %16 = vsyncpa [#allocation5], 0
    %s17 = scalar_lea.sflag [#allocation5], 1
    %18 = vsyncpa %s17, 0
    loop: start=0, step=1, limit=4
    $region2: #{tpu_custom_call.1} parent=1 // loop_pre_header
      _
    $region3: #{tpu_custom_call.1} parent=1 // loop_header
      %s20 = sphi 0, %s24
      %p21 = scmp.ge.s32.totalorder %s20, 4
      %s27 = sphi 0, %s39
      %s28 = sphi 0, %s35
      %s29 = sphi 0, %s27
      %s30 = sphi 0, %s28
      %s31 = sphi 0, %s29
      %s32 = sphi 0, %s30
      %s44 = sphi 0, %s46
      %s47 = sphi 0, %s44
      %s48 = sphi 0, %s47
      %s64 = sphi 0, %s48
      %s72 = sphi 0, %s74
      %s75 = sphi 0, %s72
      %s76 = sphi 0, %s75
      %s92 = sphi 0, %s76
      %s96 = sphi 0, %s96
      %s98 = sphi 0, %s96
      %s99 = sphi 0, %s98
      %s113 = sphi 0, %s99
      %s117 = sphi 0, %s117
      %s119 = sphi 0, %s117
      %s120 = sphi 0, %s119
      %s134 = sphi 0, %s120
      %s138 = sphi 0, %s138
      %s140 = sphi 0, %s138
      %s141 = sphi 0, %s140
      %s155 = sphi 0, %s141
      %s159 = sphi 0, %s159
      %s161 = sphi 0, %s159
      %s162 = sphi 0, %s161
      %s176 = sphi 0, %s162
      %s184 = sphi 0, %s186
      %s187 = sphi 0, %s184
      %s188 = sphi 0, %s187
      %s204 = sphi 0, %s188
      %s212 = sphi 0, %s214
      %s215 = sphi 0, %s212
      %s216 = sphi 0, %s215
      %s232 = sphi 0, %s216
    $region4: #{tpu_custom_call.1} parent=1 // loop_header_branch
      %23 = sbr.rel (%p21) target = $region8
    $region5: #{tpu_custom_call.1} parent=1 // loop_body
      %s25 = ssub.s32 %s20, 1
      %s26 = ssub.s32 %s20, 2
      %s33 = sadd.s32 1, %s28
      %p34 = scmp.ge.s32.totalorder %s33, 1
      %s35 = scalar_select %p34, 0, %s33
      %s36 = sadd.s32 1, %s27
      %s37 = scalar_select %p34, %s36, %s27
      %p38 = scmp.ge.s32.totalorder %s37, 2
      %s39 = scalar_select %p38, 0, %s37
      %s40 = ssub.s32 %s27, %s39
      %s41 = ssub.s32 %s28, %s35
      %s42 = sor.u32 %s40, %s41
      %p43 = scmp.eq.s32.totalorder %s42, 0
      %s45 = sadd.s32 %s44, 1
      %s46 = scalar_select %p43, %s44, %s45
      %p49 = pneg %p43
      %p50 = scmp.eq.s32.totalorder %s20, 1
      %p51 = por %p49, %p50
      %p52 = scmp.ne.s32.totalorder %s44, %s47
      %p53 = scmp.eq.s32.totalorder %s20, 0
      %p54 = por %p52, %p53
      %p55 = scmp.ne.s32.totalorder %s44, %s47
      %p56 = scmp.eq.s32.totalorder %s25, 1
      %p57 = por %p55, %p56
      %p58 = scmp.ne.s32.totalorder %s47, %s48
      %p59 = scmp.eq.s32.totalorder %s25, 0
      %p60 = por %p58, %p59
      %p61 = scmp.ne.s32.totalorder %s47, %s48
      %p62 = scmp.eq.s32.totalorder %s26, 1
      %p63 = por %p61, %p62
      %p65 = scmp.ne.s32.totalorder %s48, %s64
      %p66 = scmp.eq.s32.totalorder %s26, 0
      %p67 = por %p65, %p66
      %s68 = ssub.s32 %s27, %s39
      %s69 = ssub.s32 %s28, %s35
      %s70 = sor.u32 %s68, %s69
      %p71 = scmp.eq.s32.totalorder %s70, 0
      %s73 = sadd.s32 %s72, 1
      %s74 = scalar_select %p71, %s72, %s73
      %p77 = pneg %p71
      %p78 = scmp.eq.s32.totalorder %s20, 1
      %p79 = por %p77, %p78
      %p80 = scmp.ne.s32.totalorder %s72, %s75
      %p81 = scmp.eq.s32.totalorder %s20, 0
      %p82 = por %p80, %p81
      %p83 = scmp.ne.s32.totalorder %s72, %s75
      %p84 = scmp.eq.s32.totalorder %s25, 1
      %p85 = por %p83, %p84
      %p86 = scmp.ne.s32.totalorder %s75, %s76
      %p87 = scmp.eq.s32.totalorder %s25, 0
      %p88 = por %p86, %p87
      %p89 = scmp.ne.s32.totalorder %s75, %s76
      %p90 = scmp.eq.s32.totalorder %s26, 1
      %p91 = por %p89, %p90
      %p93 = scmp.ne.s32.totalorder %s76, %s92
      %p94 = scmp.eq.s32.totalorder %s26, 0
      %p95 = por %p93, %p94
      %s97 = sadd.s32 %s96, 1
      %p100 = scmp.eq.s32.totalorder %s20, 1
      %p101 = scmp.ne.s32.totalorder %s96, %s98
      %p102 = scmp.eq.s32.totalorder %s20, 0
      %p103 = por %p101, %p102
      %p104 = scmp.ne.s32.totalorder %s96, %s98
      %p105 = scmp.eq.s32.totalorder %s25, 1
      %p106 = por %p104, %p105
      %p107 = scmp.ne.s32.totalorder %s98, %s99
      %p108 = scmp.eq.s32.totalorder %s25, 0
      %p109 = por %p107, %p108
      %p110 = scmp.ne.s32.totalorder %s98, %s99
      %p111 = scmp.eq.s32.totalorder %s26, 1
      %p112 = por %p110, %p111
      %p114 = scmp.ne.s32.totalorder %s99, %s113
      %p115 = scmp.eq.s32.totalorder %s26, 0
      %p116 = por %p114, %p115
      %s118 = sadd.s32 %s117, 1
      %p121 = scmp.eq.s32.totalorder %s20, 1
      %p122 = scmp.ne.s32.totalorder %s117, %s119
      %p123 = scmp.eq.s32.totalorder %s20, 0
      %p124 = por %p122, %p123
      %p125 = scmp.ne.s32.totalorder %s117, %s119
      %p126 = scmp.eq.s32.totalorder %s25, 1
      %p127 = por %p125, %p126
      %p128 = scmp.ne.s32.totalorder %s119, %s120
      %p129 = scmp.eq.s32.totalorder %s25, 0
      %p130 = por %p128, %p129
      %p131 = scmp.ne.s32.totalorder %s119, %s120
      %p132 = scmp.eq.s32.totalorder %s26, 1
      %p133 = por %p131, %p132
      %p135 = scmp.ne.s32.totalorder %s120, %s134
      %p136 = scmp.eq.s32.totalorder %s26, 0
      %p137 = por %p135, %p136
      %s139 = sadd.s32 %s138, 1
      %p142 = scmp.eq.s32.totalorder %s20, 1
      %p143 = scmp.ne.s32.totalorder %s138, %s140
      %p144 = scmp.eq.s32.totalorder %s20, 0
      %p145 = por %p143, %p144
      %p146 = scmp.ne.s32.totalorder %s138, %s140
      %p147 = scmp.eq.s32.totalorder %s25, 1
      %p148 = por %p146, %p147
      %p149 = scmp.ne.s32.totalorder %s140, %s141
      %p150 = scmp.eq.s32.totalorder %s25, 0
      %p151 = por %p149, %p150
      %p152 = scmp.ne.s32.totalorder %s140, %s141
      %p153 = scmp.eq.s32.totalorder %s26, 1
      %p154 = por %p152, %p153
      %p156 = scmp.ne.s32.totalorder %s141, %s155
      %p157 = scmp.eq.s32.totalorder %s26, 0
      %p158 = por %p156, %p157
      %s160 = sadd.s32 %s159, 1
      %p163 = scmp.eq.s32.totalorder %s20, 1
      %p164 = scmp.ne.s32.totalorder %s159, %s161
      %p165 = scmp.eq.s32.totalorder %s20, 0
      %p166 = por %p164, %p165
      %p167 = scmp.ne.s32.totalorder %s159, %s161
      %p168 = scmp.eq.s32.totalorder %s25, 1
      %p169 = por %p167, %p168
      %p170 = scmp.ne.s32.totalorder %s161, %s162
      %p171 = scmp.eq.s32.totalorder %s25, 0
      %p172 = por %p170, %p171
      %p173 = scmp.ne.s32.totalorder %s161, %s162
      %p174 = scmp.eq.s32.totalorder %s26, 1
      %p175 = por %p173, %p174
      %p177 = scmp.ne.s32.totalorder %s162, %s176
      %p178 = scmp.eq.s32.totalorder %s26, 0
      %p179 = por %p177, %p178
      %s180 = ssub.s32 %s27, %s39
      %s181 = ssub.s32 %s28, %s35
      %s182 = sor.u32 %s180, %s181
      %p183 = scmp.eq.s32.totalorder %s182, 0
      %s185 = sadd.s32 %s184, 1
      %s186 = scalar_select %p183, %s184, %s185
      %p189 = pneg %p183
      %p190 = scmp.eq.s32.totalorder %s20, 1
      %p191 = por %p189, %p190
      %p192 = scmp.ne.s32.totalorder %s184, %s187
      %p193 = scmp.eq.s32.totalorder %s20, 0
      %p194 = por %p192, %p193
      %p195 = scmp.ne.s32.totalorder %s184, %s187
      %p196 = scmp.eq.s32.totalorder %s25, 1
      %p197 = por %p195, %p196
      %p198 = scmp.ne.s32.totalorder %s187, %s188
      %p199 = scmp.eq.s32.totalorder %s25, 0
      %p200 = por %p198, %p199
      %p201 = scmp.ne.s32.totalorder %s187, %s188
      %p202 = scmp.eq.s32.totalorder %s26, 1
      %p203 = por %p201, %p202
      %p205 = scmp.ne.s32.totalorder %s188, %s204
      %p206 = scmp.eq.s32.totalorder %s26, 0
      %p207 = por %p205, %p206
      %s208 = ssub.s32 %s27, %s39
      %s209 = ssub.s32 %s28, %s35
      %s210 = sor.u32 %s208, %s209
      %p211 = scmp.eq.s32.totalorder %s210, 0
      %s213 = sadd.s32 %s212, 1
      %s214 = scalar_select %p211, %s212, %s213
      %p217 = pneg %p211
      %p218 = scmp.eq.s32.totalorder %s20, 1
      %p219 = por %p217, %p218
      %p220 = scmp.ne.s32.totalorder %s212, %s215
      %p221 = scmp.eq.s32.totalorder %s20, 0
      %p222 = por %p220, %p221
      %p223 = scmp.ne.s32.totalorder %s212, %s215
      %p224 = scmp.eq.s32.totalorder %s25, 1
      %p225 = por %p223, %p224
      %p226 = scmp.ne.s32.totalorder %s215, %s216
      %p227 = scmp.eq.s32.totalorder %s25, 0
      %p228 = por %p226, %p227
      %p229 = scmp.ne.s32.totalorder %s215, %s216
      %p230 = scmp.eq.s32.totalorder %s26, 1
      %p231 = por %p229, %p230
      %p233 = scmp.ne.s32.totalorder %s216, %s232
      %p234 = scmp.eq.s32.totalorder %s26, 0
      %p235 = por %p233, %p234
      %p236 = scmp.le.s32.totalorder 1, %s20
      %p237 = scmp.lt.s32.totalorder %s20, 3
      %p238 = pnand %p236, %p237
      %p239 = pneg %p238
      // Predicated region
      $region9: #{tpu_custom_call.1} parent=5 // pred_check
        _
      $region10: #{tpu_custom_call.1} parent=5 // pred_check_branch
        %241 = sbr.rel (%p238) target = $region12
      $region11: #{tpu_custom_call.1} parent=5 // pred_region
        %s242 = ssub.s32 %s20, 1
        // Predicated region
        $region13: #{tpu_custom_call.1} parent=11 // pred_check
          %p243 = pneg %p109
        $region14: #{tpu_custom_call.1} parent=11 // pred_check_branch
          %245 = sbr.rel (%p243) target = $region16
        $region15: #{tpu_custom_call.1} parent=11 // pred_region
          _
        $region16: #{tpu_custom_call.1} parent=11 // pred_fallthru
          _
        // Predicated region
        $region17: #{tpu_custom_call.1} parent=11 // pred_check
          %p246 = pneg %p130
        $region18: #{tpu_custom_call.1} parent=11 // pred_check_branch
          %248 = sbr.rel (%p246) target = $region20
        $region19: #{tpu_custom_call.1} parent=11 // pred_region
          _
        $region20: #{tpu_custom_call.1} parent=11 // pred_fallthru
          _
        // Predicated region
        $region21: #{tpu_custom_call.1} parent=11 // pred_check
          %p249 = pneg %p151
        $region22: #{tpu_custom_call.1} parent=11 // pred_check_branch
          %251 = sbr.rel (%p249) target = $region24
        $region23: #{tpu_custom_call.1} parent=11 // pred_region
          _
        $region24: #{tpu_custom_call.1} parent=11 // pred_fallthru
          _
        // Predicated region
        $region25: #{tpu_custom_call.1} parent=11 // pred_check
          %p252 = pneg %p172
        $region26: #{tpu_custom_call.1} parent=11 // pred_check_branch
          %254 = sbr.rel (%p252) target = $region28
        $region27: #{tpu_custom_call.1} parent=11 // pred_region
          _
        $region28: #{tpu_custom_call.1} parent=11 // pred_fallthru
          _
      $region12: #{tpu_custom_call.1} parent=5 // pred_fallthru
        _
      %p255 = scmp.lt.s32.totalorder %s20, 2
      // Predicated region
      $region29: #{tpu_custom_call.1} parent=5 // pred_check
        %p256 = pneg %p255
      $region30: #{tpu_custom_call.1} parent=5 // pred_check_branch
        %258 = sbr.rel (%p256) target = $region32
      $region31: #{tpu_custom_call.1} parent=5 // pred_region
        // Predicated region
        $region33: #{tpu_custom_call.1} parent=31 // pred_check
          %p259 = pneg %p54
        $region34: #{tpu_custom_call.1} parent=31 // pred_check_branch
          %261 = sbr.rel (%p259) target = $region36
        $region35: #{tpu_custom_call.1} parent=31 // pred_region
          %p262 = scmp.lt.s32.totalorder %s27, 1
          %s263 = scalar_select %p262, %s27, 1
          %p264 = scmp.lt.s32.totalorder %s28, 0
          %s265 = scalar_select %p264, %s28, 0
          %s266 = sadd.s32 %s265, %s263
          %s267 = smul.addr %s266, 8
          %s268 = scalar_lea.vmem %s0, %s267
        $region36: #{tpu_custom_call.1} parent=31 // pred_fallthru
          _
        // Predicated region
        $region37: #{tpu_custom_call.1} parent=31 // pred_check
          %p269 = pneg %p82
        $region38: #{tpu_custom_call.1} parent=31 // pred_check_branch
          %271 = sbr.rel (%p269) target = $region40
        $region39: #{tpu_custom_call.1} parent=31 // pred_region
          %p272 = scmp.lt.s32.totalorder %s27, 1
          %s273 = scalar_select %p272, %s27, 1
          %p274 = scmp.lt.s32.totalorder %s28, 0
          %s275 = scalar_select %p274, %s28, 0
          %s276 = sadd.s32 %s275, %s273
          %s277 = smul.addr %s276, 8
          %s278 = scalar_lea.vmem %s1, %s277
        $region40: #{tpu_custom_call.1} parent=31 // pred_fallthru
          _
      $region32: #{tpu_custom_call.1} parent=5 // pred_fallthru
        _
      %p279 = scmp.le.s32.totalorder 1, %s20
      %p280 = scmp.lt.s32.totalorder %s20, 3
      %p281 = pnand %p279, %p280
      %p282 = pneg %p281
      // Predicated region
      $region41: #{tpu_custom_call.1} parent=5 // pred_check
        _
      $region42: #{tpu_custom_call.1} parent=5 // pred_check_branch
        %284 = sbr.rel (%p281) target = $region44
      $region43: #{tpu_custom_call.1} parent=5 // pred_region
        %s285 = ssub.s32 %s20, 1
        %p286 = scmp.lt.s32.totalorder %s29, 1
        %s287 = scalar_select %p286, %s29, 1
        %p288 = scmp.lt.s32.totalorder %s30, 0
        %s289 = scalar_select %p288, %s30, 0
        %s290 = sadd.s32 %s289, %s287
        %s291 = smul.addr %s290, 8
        %s292 = scalar_lea.vmem %s0, %s291
        %p293 = pneg %p60
        %p294 = pneg %p57
        %p295 = scmp.lt.s32.totalorder %s29, 1
        %s296 = scalar_select %p295, %s29, 1
        %p297 = scmp.lt.s32.totalorder %s30, 0
        %s298 = scalar_select %p297, %s30, 0
        %s299 = sadd.s32 %s298, %s296
        %s300 = smul.addr %s299, 8
        %s301 = scalar_lea.vmem %s1, %s300
        %p302 = pneg %p88
        %p303 = pneg %p85
        %p304 = pneg %p109
        %p305 = pneg %p106
        %p306 = pneg %p130
        %p307 = pneg %p127
        %p308 = pneg %p151
        %p309 = pneg %p148
        %p310 = pneg %p172
        %p311 = pneg %p169
        %p312 = pneg %p200
        %p313 = pneg %p197
        %s314 = sand.u32 %s187, 1
        %s315 = scalar_lea.sflag [#allocation3], %s314
        %s316 = sand.u32 %s187, 1
        %s317 = smul.addr %s316, 16
        %s318 = scalar_lea.vmem [#allocation2], %s317
        %p319 = pneg %p228
        %p320 = pneg %p225
        %s321 = sand.u32 %s215, 1
        %s322 = scalar_lea.sflag [#allocation5], %s321
        %s323 = sand.u32 %s215, 1
        %s324 = smul.addr %s323, 16
        %s325 = scalar_lea.vmem [#allocation4], %s324
        %p326 = scmp.lt.s32.totalorder %s29, 1
        %s327 = scalar_select %p326, %s29, 1
        %p328 = scmp.lt.s32.totalorder %s30, 0
        %s329 = scalar_select %p328, %s30, 0
        %s330 = sadd.s32 %s329, %s327
        %s331 = smul.addr %s330, 8
        %s332 = scalar_lea.vmem %s0, %s331
        %p333 = scmp.lt.s32.totalorder %s29, 1
        %s334 = scalar_select %p333, %s29, 1
        %p335 = scmp.lt.s32.totalorder %s30, 0
        %s336 = scalar_select %p335, %s30, 0
        %s337 = sadd.s32 %s336, %s334
        %s338 = smul.addr %s337, 8
        %s339 = scalar_lea.vmem %s1, %s338
        %v341 = vld [vmem:[%s332] sm:$0xff]
        %v342 = vpack.c.bf16 %v341, %v341
        %v343 = vld [vmem:[%s339] sm:$0xff]
        %v344 = vpack.c.bf16 %v343, %v343
        %v345 = vld [vmem:[%s2] sm:$0xf]
        %v346 = vld [vmem:[%s2 + $0x4] sm:$0xf]
        %v347 = vld [vmem:[%s2 + $0x8] sm:$0xf]
        %v348 = vld [vmem:[%s2 + $0xc] sm:$0xf]
        %v349 = vld [vmem:[%s3] sm:$0x1]
        %v351 = vperm.slane %v349, 0
        %v357 = vunpack.c.l.b16 %v345
        %v358 = vunpack.c.l.b16 %v346
        %v359 = vunpack.c.l.b16 %v347
        %v360 = vunpack.c.l.b16 %v348
        %v361 = vpack.c.b16 %v358, %v357
        %v362 = vpack.c.b16 %v360, %v359
        %vm365 = vcmask 261120
        %v367 = vsel %vm365, %v342, 0
        %369 = vmatpush.bf16.msra.mxu0 0
        %370 = vmatpush.bf16.msra.mxu0 0
        %371 = vmatpush.bf16.msra.mxu0 0
        %372 = vmatpush.bf16.msra.mxu0 0
        %373 = vmatpush.bf16.msra.mxu0 0
        %374 = vmatpush.bf16.msra.mxu0 0
        %375 = vmatpush.bf16.msra.mxu0 %v362
        %376 = vmatpush.bf16.msra.mxu0 %v361
        %377 = vmatmul.bf16.gmra.mxu0 %v367
        %v378 = vpop.f32.mrf.mxu0
        %v379 = vadd.f32 %v351, %v378
        %v380 = vpop.f32.mrf.mxu0
        %381 = vdwg.mxu0
        %v382 = vld [vmem:[%s4] sm:$0xf]
        %v383 = vld [vmem:[%s4 + $0x4] sm:$0xf]
        %v384 = vld [vmem:[%s4 + $0x8] sm:$0xf]
        %v385 = vld [vmem:[%s4 + $0xc] sm:$0xf]
        %v386 = vld [vmem:[%s5] sm:$0x1]
        %v388 = vperm.slane %v386, 0
        %v394 = vunpack.c.l.b16 %v382
        %v395 = vunpack.c.l.b16 %v383
        %v396 = vunpack.c.l.b16 %v384
        %v397 = vunpack.c.l.b16 %v385
        %v398 = vpack.c.b16 %v395, %v394
        %v399 = vpack.c.b16 %v397, %v396
        %v403 = vsel %vm365, %v344, 0
        %405 = vmatpush.bf16.msra.mxu0 0
        %406 = vmatpush.bf16.msra.mxu0 0
        %407 = vmatpush.bf16.msra.mxu0 0
        %408 = vmatpush.bf16.msra.mxu0 0
        %409 = vmatpush.bf16.msra.mxu0 0
        %410 = vmatpush.bf16.msra.mxu0 0
        %411 = vmatpush.bf16.msra.mxu0 %v399
        %412 = vmatpush.bf16.msra.mxu0 %v398
        %413 = vmatmul.bf16.gmra.mxu0 %v403
        %v414 = vpop.f32.mrf.mxu0
        %v415 = vadd.f32 %v388, %v414
        %v416 = vpop.f32.mrf.mxu0
        %417 = vdwg.mxu0
        %v418 = vpack.c.bf16 %v379, %v379
        %vm419 = vcmask 60416
        %420 = vst.msk [vmem:[%s318] sm:$0xf] %vm419, %v418
        %v421 = vpack.c.bf16 %v415, %v415
        %422 = vst.msk [vmem:[%s325] sm:$0xf] %vm419, %v421
        %s423 = scalar_lea.vmem %s2, 16
        %v424 = vld [vmem:[%s423] sm:$0xf]
        %v425 = vld [vmem:[%s423 + $0x4] sm:$0xf]
        %v426 = vld [vmem:[%s423 + $0x8] sm:$0xf]
        %v427 = vld [vmem:[%s423 + $0xc] sm:$0xf]
        %s428 = scalar_lea.vmem %s3, 1
        %v429 = vld [vmem:[%s428] sm:$0x1]
        %v431 = vperm.slane %v429, 0
        %v437 = vunpack.c.l.b16 %v424
        %v438 = vunpack.c.l.b16 %v425
        %v439 = vunpack.c.l.b16 %v426
        %v440 = vunpack.c.l.b16 %v427
        %v441 = vpack.c.b16 %v438, %v437
        %v442 = vpack.c.b16 %v440, %v439
        %445 = vmatpush.bf16.msra.mxu0 0
        %446 = vmatpush.bf16.msra.mxu0 0
        %447 = vmatpush.bf16.msra.mxu0 0
        %448 = vmatpush.bf16.msra.mxu0 0
        %449 = vmatpush.bf16.msra.mxu0 0
        %450 = vmatpush.bf16.msra.mxu0 0
        %451 = vmatpush.bf16.msra.mxu0 %v442
        %452 = vmatpush.bf16.msra.mxu0 %v441
        %453 = vmatmul.bf16.gmra.mxu0 %v367
        %v454 = vpop.f32.mrf.mxu0
        %v455 = vadd.f32 %v431, %v454
        %v456 = vpop.f32.mrf.mxu0
        %457 = vdwg.mxu0
        %s458 = scalar_lea.vmem %s4, 16
        %v459 = vld [vmem:[%s458] sm:$0xf]
        %v460 = vld [vmem:[%s458 + $0x4] sm:$0xf]
        %v461 = vld [vmem:[%s458 + $0x8] sm:$0xf]
        %v462 = vld [vmem:[%s458 + $0xc] sm:$0xf]
        %s463 = scalar_lea.vmem %s5, 1
        %v464 = vld [vmem:[%s463] sm:$0x1]
        %v466 = vperm.slane %v464, 0
        %v472 = vunpack.c.l.b16 %v459
        %v473 = vunpack.c.l.b16 %v460
        %v474 = vunpack.c.l.b16 %v461
        %v475 = vunpack.c.l.b16 %v462
        %v476 = vpack.c.b16 %v473, %v472
        %v477 = vpack.c.b16 %v475, %v474
        %480 = vmatpush.bf16.msra.mxu0 0
        %481 = vmatpush.bf16.msra.mxu0 0
        %482 = vmatpush.bf16.msra.mxu0 0
        %483 = vmatpush.bf16.msra.mxu0 0
        %484 = vmatpush.bf16.msra.mxu0 0
        %485 = vmatpush.bf16.msra.mxu0 0
        %486 = vmatpush.bf16.msra.mxu0 %v477
        %487 = vmatpush.bf16.msra.mxu0 %v476
        %488 = vmatmul.bf16.gmra.mxu0 %v403
        %v489 = vpop.f32.mrf.mxu0
        %v490 = vadd.f32 %v466, %v489
        %v491 = vpop.f32.mrf.mxu0
        %492 = vdwg.mxu0
        %v493 = vpack.c.bf16 %v455, %v455
        %s494 = scalar_lea.vmem %s318, 4 [#allocation2]
        %495 = vst.msk [vmem:[%s494] sm:$0xf] %vm419, %v493
        %v496 = vpack.c.bf16 %v490, %v490
        %s497 = scalar_lea.vmem %s325, 4 [#allocation4]
        %498 = vst.msk [vmem:[%s497] sm:$0xf] %vm419, %v496
        %s499 = scalar_lea.vmem %s2, 32
        %v500 = vld [vmem:[%s499] sm:$0xf]
        %v501 = vld [vmem:[%s499 + $0x4] sm:$0xf]
        %v502 = vld [vmem:[%s499 + $0x8] sm:$0xf]
        %v503 = vld [vmem:[%s499 + $0xc] sm:$0xf]
        %s504 = scalar_lea.vmem %s3, 2
        %v505 = vld [vmem:[%s504] sm:$0x1]
        %v507 = vperm.slane %v505, 0
        %v513 = vunpack.c.l.b16 %v500
        %v514 = vunpack.c.l.b16 %v501
        %v515 = vunpack.c.l.b16 %v502
        %v516 = vunpack.c.l.b16 %v503
        %v517 = vpack.c.b16 %v514, %v513
        %v518 = vpack.c.b16 %v516, %v515
        %521 = vmatpush.bf16.msra.mxu0 0
        %522 = vmatpush.bf16.msra.mxu0 0
        %523 = vmatpush.bf16.msra.mxu0 0
        %524 = vmatpush.bf16.msra.mxu0 0
        %525 = vmatpush.bf16.msra.mxu0 0
        %526 = vmatpush.bf16.msra.mxu0 0
        %527 = vmatpush.bf16.msra.mxu0 %v518
        %528 = vmatpush.bf16.msra.mxu0 %v517
        %529 = vmatmul.bf16.gmra.mxu0 %v367
        %v530 = vpop.f32.mrf.mxu0
        %v531 = vadd.f32 %v507, %v530
        %v532 = vpop.f32.mrf.mxu0
        %533 = vdwg.mxu0
        %s534 = scalar_lea.vmem %s4, 32
        %v535 = vld [vmem:[%s534] sm:$0xf]
        %v536 = vld [vmem:[%s534 + $0x4] sm:$0xf]
        %v537 = vld [vmem:[%s534 + $0x8] sm:$0xf]
        %v538 = vld [vmem:[%s534 + $0xc] sm:$0xf]
        %s539 = scalar_lea.vmem %s5, 2
        %v540 = vld [vmem:[%s539] sm:$0x1]
        %v542 = vperm.slane %v540, 0
        %v548 = vunpack.c.l.b16 %v535
        %v549 = vunpack.c.l.b16 %v536
        %v550 = vunpack.c.l.b16 %v537
        %v551 = vunpack.c.l.b16 %v538
        %v552 = vpack.c.b16 %v549, %v548
        %v553 = vpack.c.b16 %v551, %v550
        %556 = vmatpush.bf16.msra.mxu0 0
        %557 = vmatpush.bf16.msra.mxu0 0
        %558 = vmatpush.bf16.msra.mxu0 0
        %559 = vmatpush.bf16.msra.mxu0 0
        %560 = vmatpush.bf16.msra.mxu0 0
        %561 = vmatpush.bf16.msra.mxu0 0
        %562 = vmatpush.bf16.msra.mxu0 %v553
        %563 = vmatpush.bf16.msra.mxu0 %v552
        %564 = vmatmul.bf16.gmra.mxu0 %v403
        %v565 = vpop.f32.mrf.mxu0
        %v566 = vadd.f32 %v542, %v565
        %v567 = vpop.f32.mrf.mxu0
        %568 = vdwg.mxu0
        %v569 = vpack.c.bf16 %v531, %v531
        %s570 = scalar_lea.vmem %s318, 8 [#allocation2]
        %571 = vst.msk [vmem:[%s570] sm:$0xf] %vm419, %v569
        %v572 = vpack.c.bf16 %v566, %v566
        %s573 = scalar_lea.vmem %s325, 8 [#allocation4]
        %574 = vst.msk [vmem:[%s573] sm:$0xf] %vm419, %v572
        %s575 = scalar_lea.vmem %s2, 48
        %v576 = vld [vmem:[%s575] sm:$0xf]
        %v577 = vld [vmem:[%s575 + $0x4] sm:$0xf]
        %v578 = vld [vmem:[%s575 + $0x8] sm:$0xf]
        %v579 = vld [vmem:[%s575 + $0xc] sm:$0xf]
        %s580 = scalar_lea.vmem %s3, 3
        %v581 = vld [vmem:[%s580] sm:$0x1]
        %v583 = vperm.slane %v581, 0
        %v589 = vunpack.c.l.b16 %v576
        %v590 = vunpack.c.l.b16 %v577
        %v591 = vunpack.c.l.b16 %v578
        %v592 = vunpack.c.l.b16 %v579
        %v593 = vpack.c.b16 %v590, %v589
        %v594 = vpack.c.b16 %v592, %v591
        %597 = vmatpush.bf16.msra.mxu0 0
        %598 = vmatpush.bf16.msra.mxu0 0
        %599 = vmatpush.bf16.msra.mxu0 0
        %600 = vmatpush.bf16.msra.mxu0 0
        %601 = vmatpush.bf16.msra.mxu0 0
        %602 = vmatpush.bf16.msra.mxu0 0
        %603 = vmatpush.bf16.msra.mxu0 %v594
        %604 = vmatpush.bf16.msra.mxu0 %v593
        %605 = vmatmul.bf16.gmra.mxu0 %v367
        %v606 = vpop.f32.mrf.mxu0
        %v607 = vadd.f32 %v583, %v606
        %v608 = vpop.f32.mrf.mxu0
        %609 = vdwg.mxu0
        %s610 = scalar_lea.vmem %s4, 48
        %v611 = vld [vmem:[%s610] sm:$0xf]
        %v612 = vld [vmem:[%s610 + $0x4] sm:$0xf]
        %v613 = vld [vmem:[%s610 + $0x8] sm:$0xf]
        %v614 = vld [vmem:[%s610 + $0xc] sm:$0xf]
        %s615 = scalar_lea.vmem %s5, 3
        %v616 = vld [vmem:[%s615] sm:$0x1]
        %v618 = vperm.slane %v616, 0
        %v624 = vunpack.c.l.b16 %v611
        %v625 = vunpack.c.l.b16 %v612
        %v626 = vunpack.c.l.b16 %v613
        %v627 = vunpack.c.l.b16 %v614
        %v628 = vpack.c.b16 %v625, %v624
        %v629 = vpack.c.b16 %v627, %v626
        %632 = vmatpush.bf16.msra.mxu0 0
        %633 = vmatpush.bf16.msra.mxu0 0
        %634 = vmatpush.bf16.msra.mxu0 0
        %635 = vmatpush.bf16.msra.mxu0 0
        %636 = vmatpush.bf16.msra.mxu0 0
        %637 = vmatpush.bf16.msra.mxu0 0
        %638 = vmatpush.bf16.msra.mxu0 %v629
        %639 = vmatpush.bf16.msra.mxu0 %v628
        %640 = vmatmul.bf16.gmra.mxu0 %v403
        %v641 = vpop.f32.mrf.mxu0
        %v642 = vadd.f32 %v618, %v641
        %v643 = vpop.f32.mrf.mxu0
        %644 = vdwg.mxu0
        %v645 = vpack.c.bf16 %v607, %v607
        %s646 = scalar_lea.vmem %s318, 12 [#allocation2]
        %647 = vst.msk [vmem:[%s646] sm:$0xf] %vm419, %v645
        %v648 = vpack.c.bf16 %v642, %v642
        %s649 = scalar_lea.vmem %s325, 12 [#allocation4]
        %650 = vst.msk [vmem:[%s649] sm:$0xf] %vm419, %v648
        %s651 = sand.u32 %s187, 1
        %s652 = scalar_lea.sflag [#allocation3], %s651
        %s653 = sand.u32 %s187, 1
        %s654 = smul.addr %s653, 16
        %s655 = scalar_lea.vmem [#allocation2], %s654
        %s656 = sand.u32 %s215, 1
        %s657 = scalar_lea.sflag [#allocation5], %s656
        %s658 = sand.u32 %s215, 1
        %s659 = smul.addr %s658, 16
        %s660 = scalar_lea.vmem [#allocation4], %s659
        // Predicated region
        $region45: #{tpu_custom_call.1} parent=43 // pred_check
          %p661 = pneg %p197
        $region46: #{tpu_custom_call.1} parent=43 // pred_check_branch
          %663 = sbr.rel (%p661) target = $region48
        $region47: #{tpu_custom_call.1} parent=43 // pred_region
          %665 = vsyncadd %s652, 0
          %s666 = smul.addr %s29, 4
          %s667 = sadd.s32 %s30, %s666
          %s668 = smul.addr %s667, 4
          %s669 = scalar_lea.hbm %s6, %s668
          %s670 = sshll.u32 %s655, 4
          %s671 = int_to_ptr.vmem [resolvable:$true] %s670
          %s672 = sshll.u32 %s669, 4
          %s673 = int_to_ptr.hbm [resolvable:$true] %s672
          %678 = dma.vmem_to_hbm [thread:$0]  %s671, 256, %s673, %s652, 64, 64, 4
        $region48: #{tpu_custom_call.1} parent=43 // pred_fallthru
          _
        // Predicated region
        $region49: #{tpu_custom_call.1} parent=43 // pred_check
          %p679 = pneg %p225
        $region50: #{tpu_custom_call.1} parent=43 // pred_check_branch
          %681 = sbr.rel (%p679) target = $region52
        $region51: #{tpu_custom_call.1} parent=43 // pred_region
          %683 = vsyncadd %s657, 0
          %s684 = smul.addr %s29, 4
          %s685 = sadd.s32 %s30, %s684
          %s686 = smul.addr %s685, 4
          %s687 = scalar_lea.hbm %s7, %s686
          %s688 = sshll.u32 %s660, 4
          %s689 = int_to_ptr.vmem [resolvable:$true] %s688
          %s690 = sshll.u32 %s687, 4
          %s691 = int_to_ptr.hbm [resolvable:$true] %s690
          %696 = dma.vmem_to_hbm [thread:$0]  %s689, 256, %s691, %s657, 64, 64, 4
        $region52: #{tpu_custom_call.1} parent=43 // pred_fallthru
          _
      $region44: #{tpu_custom_call.1} parent=5 // pred_fallthru
        _
      %p697 = scmp.le.s32.totalorder 2, %s20
      // Predicated region
      $region53: #{tpu_custom_call.1} parent=5 // pred_check
        %p698 = pneg %p697
      $region54: #{tpu_custom_call.1} parent=5 // pred_check_branch
        %700 = sbr.rel (%p698) target = $region56
      $region55: #{tpu_custom_call.1} parent=5 // pred_region
        %s701 = ssub.s32 %s20, 2
        // Predicated region
        $region57: #{tpu_custom_call.1} parent=55 // pred_check
          %p702 = pneg %p203
        $region58: #{tpu_custom_call.1} parent=55 // pred_check_branch
          %704 = sbr.rel (%p702) target = $region60
        $region59: #{tpu_custom_call.1} parent=55 // pred_region
          %s705 = sand.u32 %s188, 1
          %s706 = scalar_lea.sflag [#allocation3], %s705
          %s707 = sand.u32 %s188, 1
          %s708 = smul.addr %s707, 16
          %s709 = scalar_lea.vmem [#allocation2], %s708
          %711 = dma.done %s706, 256
        $region60: #{tpu_custom_call.1} parent=55 // pred_fallthru
          _
        // Predicated region
        $region61: #{tpu_custom_call.1} parent=55 // pred_check
          %p712 = pneg %p231
        $region62: #{tpu_custom_call.1} parent=55 // pred_check_branch
          %714 = sbr.rel (%p712) target = $region64
        $region63: #{tpu_custom_call.1} parent=55 // pred_region
          %s715 = sand.u32 %s216, 1
          %s716 = scalar_lea.sflag [#allocation5], %s715
          %s717 = sand.u32 %s216, 1
          %s718 = smul.addr %s717, 16
          %s719 = scalar_lea.vmem [#allocation4], %s718
          %721 = dma.done %s716, 256
        $region64: #{tpu_custom_call.1} parent=55 // pred_fallthru
          _
      $region56: #{tpu_custom_call.1} parent=5 // pred_fallthru
        _
    $region6: #{tpu_custom_call.1} parent=1 // loop_footer
      %s24 = sadd.s32 1, %s20
    $region7: #{tpu_custom_call.1} parent=1 // loop_footer_branch
      %19 = sbr.rel target = $region3
    $region8: #{tpu_custom_call.1} parent=1 // loop_exit
      _
    %722 = vsyncpa [#allocation3], 1
    %s723 = scalar_lea.sflag [#allocation3], 1
    %724 = vsyncpa %s723, 1
    %725 = vsyncpa [#allocation5], 1
    %s726 = scalar_lea.sflag [#allocation5], 1
    %727 = vsyncpa %s726, 1

</llo_original>
